<compile_context>
chip_gen: v7x
topology: tpu7x:2x2x1
jax: 0.10.0
libtpu: 0.0.40
codegen_flags: <defaults>
</compile_context>

<pallas_src>
import math

import jax
import jax.numpy as jnp
from jax.experimental import pallas as pl
from jax.experimental.pallas import tpu as pltpu


def _round_up(x, m):
    return ((x + m - 1) // m) * m


def _gated_tanh_kernel(x_ref, w_ref, b_ref, o_ref):
    # (tm, K) @ (K, tn) on the MXU with f32 accumulation; bias + relu on VPU.
    y = jnp.dot(x_ref[...], w_ref[...], preferred_element_type=jnp.float32)
    y = y + b_ref[...].astype(jnp.float32)
    o_ref[...] = jnp.maximum(y, 0.0).astype(o_ref.dtype)


def _vmem_capacity_bytes():
    """Per-core VMEM capacity, with a v7x-safe fallback if the query fails."""
    try:
        cap = getattr(pltpu.get_tpu_info(), "vmem_capacity_bytes", None)
        if cap:
            return int(cap)
    except Exception:
        pass
    return 64 * 1024 * 1024  # v7x per-TC capacity; conservative on v5e/v6e.


def prepare_gated_tanh_params(w_gate, b_gate):
    """One-time (cacheable) layout prep for the kernel.

    w_gate: (output_dim, input_dim)   -- PyTorch Linear weight layout
    b_gate: (output_dim,)

    Returns (w_t, b2d, output_dim) where
      w_t: (input_dim, n_pad)  -- transposed and lane-padded to a multiple of 128
      b2d: (1, n_pad)
    so the hot path needs no per-call pad and no per-grid-step transpose.
    """
    out_dim, in_dim = w_gate.shape
    n_pad = _round_up(out_dim, 128)
    w_t = jnp.swapaxes(w_gate, 0, 1)
    b = b_gate
    if n_pad != out_dim:
        w_t = jnp.pad(w_t, ((0, 0), (0, n_pad - out_dim)))
        b = jnp.pad(b, ((0, n_pad - out_dim),))
    return w_t, b.reshape(1, n_pad), out_dim


def _select_tiles(m, in_dim, n_pad, x_itemsize, w_itemsize, out_itemsize,
                  budget):
    """Pick (tm, tn) so double-buffered tiles fit within `budget` bytes of VMEM."""
    # tn: largest multiple of 128 dividing n_pad whose (double-buffered) weight
    # tile fits half the budget. Prefer the fully VMEM-resident weight.
    units = n_pad // 128
    tn = 128
    for d in range(units, 0, -1):
        if units % d == 0 and 2 * in_dim * (d * 128) * w_itemsize <= budget // 2:
            tn = d * 128
            break
    # tm: fill the remaining budget with double-buffered x / out tiles.
    fixed = 2 * in_dim * tn * w_itemsize + 2 * tn * 4          # weight + bias buffers
    per_row = 2 * (in_dim * x_itemsize + tn * out_itemsize)    # x + out buffers per row
    row_align = max(8, 32 // x_itemsize)  # 8 rows f32, 16 bf16, 32 int8/fp8
    tm = max(budget - fixed, 0) // per_row
    tm = (tm // row_align) * row_align
    tm = max(row_align, min(tm, 8192, _round_up(m, row_align)))
    return tm, tn


def gated_tanh_forward(x, params):
    """relu(x @ w_gate^T + b_gate), matching torch.nn.Linear semantics.

    x:      (..., input_dim)
    params: output of prepare_gated_tanh_params(w_gate, b_gate)
    """
    w_t, b2d, out_dim = params
    in_dim = x.shape[-1]
    n_pad = w_t.shape[1]
    lead_shape = x.shape[:-1]
    m = int(math.prod(lead_shape)) if lead_shape else 1
    x2d = x.reshape(m, in_dim)

    x_isz = jnp.dtype(x.dtype).itemsize
    w_isz = jnp.dtype(w_t.dtype).itemsize
    o_isz = x_isz

    vmem_cap = _vmem_capacity_bytes()
    vmem_limit = (vmem_cap * 3) // 4   # leave headroom for compiler scratch
    budget = (vmem_limit * 4) // 5     # working-set target under the limit

    tm, tn = _select_tiles(m, in_dim, n_pad, x_isz, w_isz, o_isz, budget)
    grid_n = n_pad // tn               # tn divides n_pad; weight blocks in-bounds
    grid_m = pl.cdiv(m, tm)            # partial final M block handled by masking

    out2d = pl.pallas_call(
        _gated_tanh_kernel,
        out_shape=jax.ShapeDtypeStruct((m, out_dim), x.dtype),
        grid_spec=pltpu.PrefetchScalarGridSpec(
            num_scalar_prefetch=0,
            # N outer / M inner: each weight tile is DMA'd once and stays
            # VMEM-resident across the inner sweep over M.
            grid=(grid_n, grid_m),
            in_specs=[
                pl.BlockSpec((tm, in_dim), lambda j, i: (i, 0)),   # x, streamed over M
                pl.BlockSpec((in_dim, tn), lambda j, i: (0, j)),   # weight, streamed over N
                pl.BlockSpec((1, tn), lambda j, i: (0, j)),        # bias
            ],
            out_specs=pl.BlockSpec((tm, tn), lambda j, i: (i, j)),
        ),
        compiler_params=pltpu.CompilerParams(
            # Both axes are independent; parallel lets v7x shard them over
            # its two TensorCores (harmless on v5e/v6e).
            dimension_semantics=("parallel", "parallel"),
            vmem_limit_bytes=vmem_limit,
        ),
    )(x2d, w_t, b2d)

    return out2d.reshape(*lead_shape, out_dim)


def init_gated_tanh_params(key, input_dim, output_dim, dtype=jnp.float32):
    """Deterministic parameter init mirroring the module's __init__.

    gate_layer.weight: xavier_uniform_ with gain = calculate_gain('relu') = sqrt(2)
    gate_layer.bias:   PyTorch Linear default, U(-1/sqrt(fan_in), 1/sqrt(fan_in))
    """
    kw, kb = jax.random.split(key)
    gain = math.sqrt(2.0)
    bound_w = gain * math.sqrt(6.0 / (input_dim + output_dim))
    w_gate = jax.random.uniform(
        kw, (output_dim, input_dim), dtype=dtype, minval=-bound_w, maxval=bound_w
    )
    bound_b = 1.0 / math.sqrt(input_dim)
    b_gate = jax.random.uniform(
        kb, (output_dim,), dtype=dtype, minval=-bound_b, maxval=bound_b
    )
    return w_gate, b_gate


if __name__ == "__main__":
    key = jax.random.PRNGKey(0)
    k_x, k_p = jax.random.split(key)

    batch, seq, input_dim, output_dim = 2, 8, 32, 64

    x = jax.random.normal(k_x, (batch, seq, input_dim), dtype=jnp.float32)
    w_gate, b_gate = init_gated_tanh_params(k_p, input_dim, output_dim)

    # One-time layout prep (transpose + lane-pad), outside the hot path.
    params = prepare_gated_tanh_params(w_gate, b_gate)

    out = gated_tanh_forward(x, params)
    jax.block_until_ready(out)

    # Sanity check against plain-JAX reference on the original PyTorch layout.
    ref = jnp.maximum(jnp.einsum("bsk,nk->bsn", x, w_gate) + b_gate, 0.0)
    assert out.shape == (batch, seq, output_dim)
    assert jnp.allclose(out, ref, atol=1e-5, rtol=1e-5)

    print("KERNEL_OK")
</pallas_src>

<mosaic_0001>
module attributes {stable_mosaic.version = 11 : i64} {
  func.func @_gated_tanh_kernel(%arg0: i32, %arg1: i32, %arg2: memref<16x32xf32, #tpu.memory_space<vmem>>, %arg3: memref<32x128xf32, #tpu.memory_space<vmem>>, %arg4: memref<1x128xf32, #tpu.memory_space<vmem>>, %arg5: memref<16x128xf32, #tpu.memory_space<vmem>>) attributes {dimension_semantics = [#tpu.dimension_semantics<parallel>, #tpu.dimension_semantics<parallel>], iteration_bounds = array<i64: 1, 1>, scalar_prefetch = 0 : i64, scratch_operands = 0 : i64, tpu.core_type = #tpu.core_type<tc>, window_params = [{transform_indices = @transform_0, window_bounds = array<i64: 16, 32>}, {transform_indices = @transform_1, window_bounds = array<i64: 32, 128>}, {transform_indices = @transform_2, window_bounds = array<i64: 1, 128>}, {transform_indices = @transform_3, window_bounds = array<i64: 16, 128>}]} {
    %c0 = arith.constant 0 : index
    %c0_0 = arith.constant 0 : index
    %0 = vector.load %arg2[%c0, %c0_0] : memref<16x32xf32, #tpu.memory_space<vmem>>, vector<16x32xf32>
    %c0_1 = arith.constant 0 : index
    %c0_2 = arith.constant 0 : index
    %1 = vector.load %arg3[%c0_1, %c0_2] : memref<32x128xf32, #tpu.memory_space<vmem>>, vector<32x128xf32>
    %cst = arith.constant dense<0.000000e+00> : vector<16x128xf32>
    %2 = tpu.matmul %0, %1, %cst {dimension_numbers = #tpu.dot_dimension_numbers<[1], [0], [0], [1], [0, 0, 1, 1], [], []>} : vector<16x32xf32>, vector<32x128xf32>, vector<16x128xf32> -> vector<16x128xf32>
    %c0_3 = arith.constant 0 : index
    %c0_4 = arith.constant 0 : index
    %3 = vector.load %arg4[%c0_3, %c0_4] : memref<1x128xf32, #tpu.memory_space<vmem>>, vector<1x128xf32>
    %4 = vector.broadcast %3 : vector<1x128xf32> to vector<16x128xf32>
    %5 = arith.addf %2, %4 : vector<16x128xf32>
    %cst_5 = arith.constant 0.000000e+00 : f32
    %6 = vector.broadcast %cst_5 : f32 to vector<16x128xf32>
    %7 = arith.maximumf %5, %6 : vector<16x128xf32>
    %c0_6 = arith.constant 0 : index
    %c0_7 = arith.constant 0 : index
    %8 = vector.load %arg5[%c0_6, %c0_7] : memref<16x128xf32, #tpu.memory_space<vmem>>, vector<16x128xf32>
    tpu.vector_store %arg5[%c0_6, %c0_7], %7 {strides = array<i32>} : memref<16x128xf32, #tpu.memory_space<vmem>>, vector<16x128xf32>,
    return
  }
  func.func @transform_0(%arg0: i32, %arg1: i32) -> (i32, i32) {
    %c0_i32 = arith.constant 0 : i32
    %c0_i32_0 = arith.constant 0 : i32
    return %arg1, %c0_i32 : i32, i32
  }
  func.func @transform_1(%arg0: i32, %arg1: i32) -> (i32, i32) {
    %c0_i32 = arith.constant 0 : i32
    %c0_i32_0 = arith.constant 0 : i32
    return %c0_i32, %arg0 : i32, i32
  }
  func.func @transform_2(%arg0: i32, %arg1: i32) -> (i32, i32) {
    %c0_i32 = arith.constant 0 : i32
    %c0_i32_0 = arith.constant 0 : i32
    return %c0_i32, %arg0 : i32, i32
  }
  func.func @transform_3(%arg0: i32, %arg1: i32) -> (i32, i32) {
    %c0_i32 = arith.constant 0 : i32
    return %arg1, %arg0 : i32, i32
  }
}

</mosaic_0001>

<llo_original>
// kernel: tpu_custom_call.1
$region0: #{tpu_custom_call.1}
  #allocation0 [shape = 'u32[]', space=smem, size = 0x4, offset = 0x4, fixed_abs, tag = 'smem constant byte address 0x4 - core index']
  #allocation1 [shape = 'u32[144,128]{1,0:T(1,128)}', space=vmem, size = 0x12000, scoped, tag = 'internal scratch']
  %s0 = inlined_call_operand.hbm [shape: f32[16,32], index: 0, kind: input, shape index: {}]
  %s1 = inlined_call_operand.hbm [shape: f32[32,128], index: 1, kind: input, shape index: {}]
  %s2 = inlined_call_operand.vmem [shape: f32[1,128], index: 2, kind: input, shape index: {}]
  %s3 = inlined_call_operand.hbm [shape: f32[16,64], index: 3, kind: output, shape index: {}]
  %s4 = sld [smem:[#allocation0]]
  $region30: #{tpu_custom_call.1} parent=0
    _
  %s6 = ssub.s32 1, %s4
  %s7 = scalar_select 0, %s6, %s4
  $region1: #{tpu_custom_call.1} parent=0
    #allocation2 [shape = 'u8[8192]{0}', space=vmem, size = 0x2000, scoped, tag = 'input window, operand 0, single buffered']
    #allocation3 [shape = 's32[1]{0}', space=sflag, size = 0x4, scoped, tag = 'scoped memory for tpu_custom_call.1']
    #allocation4 [shape = 's32[1]{0}', space=sflag, size = 0x4, scoped, tag = 'scoped memory for tpu_custom_call.1']
    #allocation5 [shape = 'u8[16384]{0}', space=vmem, size = 0x4000, scoped, tag = 'input window, operand 1, single buffered']
    #allocation6 [shape = 's32[1]{0}', space=sflag, size = 0x4, scoped, tag = 'scoped memory for tpu_custom_call.1']
    #allocation7 [shape = 'u8[8192]{0}', space=vmem, size = 0x2000, scoped, tag = 'output window, operand 0, single buffered']
    %8 = vsyncpa [#allocation3], 0
    %9 = vsyncpa [#allocation6], 0
    %10 = vsyncpa [#allocation4], 0
    // Predicated region
    $region2: #{tpu_custom_call.1} parent=1 // pred_check
      _
    $region3: #{tpu_custom_call.1} parent=1 // pred_check_branch
      %12 = sbr.rel (0) target = $region5
    $region4: #{tpu_custom_call.1} parent=1 // pred_region
      %s14 = ssub.s32 256, 256
      %15 = vsyncadd [#allocation3], %s14
      %s16 = sshll.u32 [#allocation2], 4
      %s17 = int_to_ptr.vmem [resolvable:$true] %s16
      %22 = dma.hbm_to_vmem [thread:$0]  %s0, 256, %s17, [#allocation3], 128, 128, 8
    $region5: #{tpu_custom_call.1} parent=1 // pred_fallthru
      _
    // Predicated region
    $region6: #{tpu_custom_call.1} parent=1 // pred_check
      _
    $region7: #{tpu_custom_call.1} parent=1 // pred_check_branch
      %24 = sbr.rel (0) target = $region9
    $region8: #{tpu_custom_call.1} parent=1 // pred_region
      %s26 = ssub.s32 512, 512
      %27 = vsyncadd [#allocation6], %s26
      %s28 = sshll.u32 [#allocation5], 4
      %s29 = int_to_ptr.vmem [resolvable:$true] %s28
      %34 = dma.hbm_to_vmem [thread:$0]  %s1, 512, %s29, [#allocation6], 128, 128, 8
    $region9: #{tpu_custom_call.1} parent=1 // pred_fallthru
      _
    // Predicated region
    $region10: #{tpu_custom_call.1} parent=1 // pred_check
      _
    $region11: #{tpu_custom_call.1} parent=1 // pred_check_branch
      %36 = sbr.rel (0) target = $region13
    $region12: #{tpu_custom_call.1} parent=1 // pred_region
      _
    $region13: #{tpu_custom_call.1} parent=1 // pred_fallthru
      _
    // Predicated region
    $region14: #{tpu_custom_call.1} parent=1 // pred_check
      _
    $region15: #{tpu_custom_call.1} parent=1 // pred_check_branch
      %38 = sbr.rel (0) target = $region17
    $region16: #{tpu_custom_call.1} parent=1 // pred_region
      %39 = dma.done [#allocation3], 256
    $region17: #{tpu_custom_call.1} parent=1 // pred_fallthru
      _
    // Predicated region
    $region18: #{tpu_custom_call.1} parent=1 // pred_check
      _
    $region19: #{tpu_custom_call.1} parent=1 // pred_check_branch
      %41 = sbr.rel (0) target = $region21
    $region20: #{tpu_custom_call.1} parent=1 // pred_region
      %42 = dma.done [#allocation6], 512
    $region21: #{tpu_custom_call.1} parent=1 // pred_fallthru
      _
    %v43 = vld [vmem:[#allocation2] sm:$0xff]
    %v44 = vld [vmem:[#allocation2 + $0x8] sm:$0xff]
    %v45 = vld [vmem:[#allocation5] sm:$0xff]
    %v46 = vld [vmem:[#allocation5 + $0x8] sm:$0xff]
    %v47 = vld [vmem:[#allocation5 + $0x10] sm:$0xff]
    %v48 = vld [vmem:[#allocation5 + $0x18] sm:$0xff]
    %v49 = vld [vmem:[%s2] sm:$0x1]
    %v51 = vlaneseq
    %v52 = vshrl.u32 %v51, 7
    %v53 = vsub.s32 0, %v52
    %v54 = vrot.slane %v49, %v53
    %vm56 = vcmask 261120
    %v58 = vsel %vm56, %v43, 0
    %v61 = vsel %vm56, %v44, 0
    %63 = vmatprep.subr.mxu0 0.0
    %64 = vmatpush1.msra.mxu0 %v45
    %65 = vmatprep.subr.mxu0 0.0
    %66 = vmatpush1.msra.mxu0 %v46
    %67 = vmatprep.subr.mxu0 0.0
    %68 = vmatpush1.msra.mxu0 %v47
    %69 = vmatprep.subr.mxu0 0.0
    %70 = vmatpush1.msra.mxu0 %v48
    %71 = vmatprep.subr.mxu0 0.0
    %72 = vmatpush1.msra.mxu0 0.0
    %73 = vmatprep.subr.mxu0 0.0
    %74 = vmatpush1.msra.mxu0 0.0
    %75 = vmatprep.subr.mxu0 0.0
    %76 = vmatpush1.msra.mxu0 0.0
    %77 = vmatprep.subr.mxu0 0.0
    %78 = vmatpush1.msra.mxu0 0.0
    %79 = vmatprep.subr.mxu0 0.0
    %80 = vmatpush1.msra.mxu0 0.0
    %81 = vmatprep.subr.mxu0 0.0
    %82 = vmatpush1.msra.mxu0 0.0
    %83 = vmatprep.subr.mxu0 0.0
    %84 = vmatpush1.msra.mxu0 0.0
    %85 = vmatprep.subr.mxu0 0.0
    %86 = vmatpush1.msra.mxu0 0.0
    %87 = vmatprep.subr.mxu0 0.0
    %88 = vmatpush1.msra.mxu0 0.0
    %89 = vmatprep.subr.mxu0 0.0
    %90 = vmatpush1.msra.mxu0 0.0
    %91 = vmatprep.subr.mxu0 0.0
    %92 = vmatpush1.msra.mxu0 0.0
    %93 = vmatprep.subr.mxu0 0.0
    %94 = vmatpush1.msra.mxu0 0.0
    %95 = vmatprep.subr.mxu0 0.0
    %96 = vmatpush1.msra.mxu0 0.0
    %97 = vmatprep.subr.mxu0 0.0
    %98 = vmatpush1.msra.mxu0 0.0
    %99 = vmatprep.subr.mxu0 0.0
    %100 = vmatpush1.msra.mxu0 0.0
    %101 = vmatprep.subr.mxu0 0.0
    %102 = vmatpush1.msra.mxu0 0.0
    %103 = vmatprep.subr.mxu0 0.0
    %104 = vmatpush1.msra.mxu0 0.0
    %105 = vmatprep.subr.mxu0 0.0
    %106 = vmatpush1.msra.mxu0 0.0
    %107 = vmatprep.subr.mxu0 0.0
    %108 = vmatpush1.msra.mxu0 0.0
    %109 = vmatprep.subr.mxu0 0.0
    %110 = vmatpush1.msra.mxu0 0.0
    %111 = vmatprep.subr.mxu0 0.0
    %112 = vmatpush1.msra.mxu0 0.0
    %113 = vmatprep.subr.mxu0 0.0
    %114 = vmatpush1.msra.mxu0 0.0
    %115 = vmatprep.subr.mxu0 0.0
    %116 = vmatpush1.msra.mxu0 0.0
    %117 = vmatprep.subr.mxu0 0.0
    %118 = vmatpush1.msra.mxu0 0.0
    %119 = vmatprep.subr.mxu0 0.0
    %120 = vmatpush1.msra.mxu0 0.0
    %121 = vmatprep.subr.mxu0 0.0
    %122 = vmatpush1.msra.mxu0 0.0
    %123 = vmatprep.subr.mxu0 0.0
    %124 = vmatpush1.msra.mxu0 0.0
    %125 = vmatprep.subr.mxu0 0.0
    %126 = vmatpush1.msra.mxu0 0.0
    %127 = vmatprep.mubr.f32.mxu0 0.0
    %128 = vmatmul.mubr.f32.gmra.mrb[0].mxu0 %v58
    %v129 = vpop.f32.mrb[0].mxu0
    %v130 = vadd.f32 %v54, %v129
    %v131 = vpop.f32.mrb[0].mxu0
    %132 = vmatprep.mubr.f32.mxu0 0.0
    %133 = vmatmul.mubr.f32.gmra.mrb[0].mxu0 %v61
    %v134 = vpop.f32.mrb[0].mxu0
    %v135 = vadd.f32 %v54, %v134
    %v136 = vpop.f32.mrb[0].mxu0
    %137 = vdwg.mxu0
    %v138 = vmax.f32 %v130, 0.0
    %v139 = vmax.f32 %v135, 0.0
    %140 = vst [vmem:[#allocation7] sm:$0xff] %v138
    %141 = vst [vmem:[#allocation7 + $0x8] sm:$0xff] %v139
    // Predicated region
    $region22: #{tpu_custom_call.1} parent=1 // pred_check
      _
    $region23: #{tpu_custom_call.1} parent=1 // pred_check_branch
      %143 = sbr.rel (0) target = $region25
    $region24: #{tpu_custom_call.1} parent=1 // pred_region
      %s145 = ssub.s32 256, 256
      %146 = vsyncadd [#allocation4], %s145
      %s147 = sshll.u32 [#allocation7], 4
      %s148 = int_to_ptr.vmem [resolvable:$true] %s147
      %153 = dma.vmem_to_hbm [thread:$0]  %s148, 256, %s3, [#allocation4], 128, 128, 8
    $region25: #{tpu_custom_call.1} parent=1 // pred_fallthru
      _
    // Predicated region
    $region26: #{tpu_custom_call.1} parent=1 // pred_check
      _
    $region27: #{tpu_custom_call.1} parent=1 // pred_check_branch
      %155 = sbr.rel (0) target = $region29
    $region28: #{tpu_custom_call.1} parent=1 // pred_region
      %156 = dma.done [#allocation4], 256
    $region29: #{tpu_custom_call.1} parent=1 // pred_fallthru
      _
    %157 = vsyncpa [#allocation3], 1
    %158 = vsyncpa [#allocation6], 1
    %159 = vsyncpa [#allocation4], 1

</llo_original>
